<compile_context>
chip_gen: v5e
topology: v5e:2x2
jax: 0.10.0
libtpu: 0.0.40
codegen_flags: <defaults>
</compile_context>

<pallas_src>
import numpy as np

import jax
import jax.numpy as jnp
from jax.experimental import pallas as pl
from jax.experimental.pallas import tpu as pltpu


def _hbm_identity_kernel(x_hbm, o_hbm, sem):
    # TODO(synk): the reference forward() raises NotImplementedError (abstract
    # base class), so there is no concrete compute to translate; the kernel is
    # a single direct HBM->HBM DMA of the whole tensor (identity pass).
    cp = pltpu.make_async_copy(x_hbm, o_hbm, sem)
    cp.start()
    cp.wait()


@jax.jit
def _identity_dma(x):
    """Identity pass through a Pallas kernel: one whole-array HBM->HBM DMA."""
    return pl.pallas_call(
        _hbm_identity_kernel,
        out_shape=jax.ShapeDtypeStruct(x.shape, x.dtype),
        in_specs=[pl.BlockSpec(memory_space=pl.ANY)],   # raw HBM ref, no auto-DMA
        out_specs=pl.BlockSpec(memory_space=pl.ANY),    # raw HBM ref, no auto-DMA
        scratch_shapes=[pltpu.SemaphoreType.DMA],       # completion semaphore
    )(x)


class EncoderPallas:
    """JAX/Pallas counterpart of the abstract `Encoder` backbone base class.

    Holds `args` (like the PyTorch __init__) and exposes a forward() whose
    data path runs through a Pallas TPU kernel.  No parameters are created,
    matching the reference module.
    """

    def __init__(self, args=None):
        self.args = args

    def forward(self, x):
        x = jnp.asarray(x)
        if x.size == 0:
            # Empty tensor: nothing to copy; the DMA grid would be degenerate.
            return x
        if x.ndim == 0:
            # 0-d scalar: give the DMA a 1-d view, then restore the shape.
            return _identity_dma(x.reshape(1)).reshape(())
        return _identity_dma(x)

    def __call__(self, x):
        return self.forward(x)


if __name__ == "__main__":
    key = jax.random.PRNGKey(0)
    encoder = EncoderPallas(args=None)

    # NCHW-style inputs matching the PyTorch conv backbone convention, plus
    # shapes that exercise the awkward-size and large multi-MiB paths.
    test_shapes = [
        (2, 4, 16, 16),      # small demo shape
        (3, 5, 7, 9),        # awkward size (not a multiple of 128 elements)
        (1, 1, 4096, 256),   # ~4 MiB — large single-DMA path
        (2, 4, 0, 16),       # empty tensor — short-circuit path
    ]

    for shape in test_shapes:
        key, sub = jax.random.split(key)
        x = jax.random.normal(sub, shape, dtype=jnp.float32)
        expected = np.asarray(x)  # host copy before the call

        y = jax.block_until_ready(encoder(x))

        assert y.shape == x.shape and y.dtype == x.dtype
        assert np.allclose(np.asarray(y), expected), f"identity mismatch for {shape}"

    # bf16 sanity check (the DMA path is dtype-agnostic).
    key, sub = jax.random.split(key)
    xb = jax.random.normal(sub, (2, 4, 16, 16), dtype=jnp.bfloat16)
    yb = jax.block_until_ready(encoder(xb))
    assert yb.shape == xb.shape and yb.dtype == xb.dtype
    assert np.array_equal(np.asarray(yb), np.asarray(xb))

    print("KERNEL_OK")
</pallas_src>

<mosaic_0001>
module attributes {stable_mosaic.version = 11 : i64} {
  func.func @_hbm_identity_kernel(%arg0: memref<2x4x16x16xf32, #tpu.memory_space<any>>, %arg1: memref<2x4x16x16xf32, #tpu.memory_space<any>>, %arg2: memref<!tpu.dma_semaphore, #tpu.memory_space<semaphore_mem>>) attributes {dimension_semantics = [], scalar_prefetch = 0 : i64, scratch_operands = 1 : i64, tpu.core_type = #tpu.core_type<tc>} {
    tpu.enqueue_dma source(%arg0 : memref<2x4x16x16xf32, #tpu.memory_space<any>>) target(%arg1 : memref<2x4x16x16xf32, #tpu.memory_space<any>>) target_semaphore(%arg2 : memref<!tpu.dma_semaphore, #tpu.memory_space<semaphore_mem>>)
    tpu.wait_dma2 semaphore(%arg2 : memref<!tpu.dma_semaphore, #tpu.memory_space<semaphore_mem>>) src(%arg0 : memref<2x4x16x16xf32, #tpu.memory_space<any>>) dst(%arg1 : memref<2x4x16x16xf32, #tpu.memory_space<any>>)
    return
  }
}

</mosaic_0001>

<llo_original>
// kernel: _identity_dma.1
$region0: #{_identity_dma.1}
  #allocation0 [shape = 'u32[]', space=smem, size = 0x4, offset = 0x4, fixed_abs, tag = 'smem constant byte address 0x4 - core index']
  #allocation1 [shape = 'u32[72,128]{1,0:T(1,128)}', space=vmem, size = 0x9000, scoped, tag = 'internal scratch']
  #allocation2 [shape = 's32[1]{0}', space=sflag, size = 0x4, scoped, tag = 'scratch operand']
  #allocation3 [shape = 's32[]', space=sflag, size = 0x4, offset = 0, fixed_abs, tag = 'sflag constant byte address 0x0 - dummy sync flag']
  #allocation4 [shape = 'u32[0]{0}', space=smem, size = 0, offset = 0, fixed_abs, tag = 'smem constant byte address 0x0 - null']
  %s0 = inlined_call_operand.hbm [shape: f32[2,4,16,16], index: 0, kind: input, shape index: {}]
  %s1 = inlined_call_operand.hbm [shape: f32[2,4,16,16], index: 1, kind: output, shape index: {}]
  %s2 = sld [smem:[#allocation0]]
  $region2: #{_identity_dma.1} parent=0
    _
  %s4 = ssub.s32 1, %s2
  %s5 = scalar_select 0, %s4, %s2
  %s7 = sshll.u32 1, 14
  %s8 = sxor.u32 4294967295, %s7
  %s10 = sshll.u32 %s0, 4
  %s11 = int_to_ptr.hbm [resolvable:$true] %s10
  %s12 = sshll.u32 %s1, 4
  %s13 = int_to_ptr.hbm [resolvable:$true] %s12
  %16 = dma.general %s11, 2048, %s13, [#allocation2], [#allocation3], [#allocation4], 0, 0
  %s17 = smul.u32 2, 4
  %s18 = smul.u32 %s17, 16
  %s19 = smul.u32 %s18, 1
  %s20 = sshll.u32 %s19, 4
  %21 = dma.done [#allocation2], %s20
  %22 = vsyncmov [#allocation2]
  %s23 = vpop.sfrf %22
  %p24 = scmp.eq.s32.totalorder %s23, 0
  %p25 = pneg %p24
  %27 = shalt.err (%p25)

</llo_original>
